<compile_context>
chip_gen: v7x
topology: tpu7x:2x2x1
jax: 0.10.0
libtpu: 0.0.40
codegen_flags: <defaults>
</compile_context>

<pallas_src>
import math

import jax
import jax.numpy as jnp
from jax.experimental import pallas as pl
from jax.experimental.pallas import tpu as pltpu

_LANE = 128
_TILE_TARGET_BYTES = 6 * 1024 * 1024   # per-buffer tile target (~6 MiB)
_VMEM_LIMIT_BYTES = 32 * 1024 * 1024   # 4 buffers * 6 MiB ~= 24 MiB < 32 MiB


def _copy_kernel(x_ref, o_ref):
    # Identity copy of a lane-dense tile: straight vld/vst, no relayout.
    o_ref[...] = x_ref[...]


def _round_up(x: int, m: int) -> int:
    return ((x + m - 1) // m) * m


def _sublane_granularity(itemsize: int) -> int:
    # Sub-32-bit dtypes pack along sublanes: 8 rows (32-bit), 16 (bf16), 32 (int8).
    packing = max(1, 4 // itemsize)
    return 8 * packing


def _tile_rows(rows: int, itemsize: int) -> int:
    """Row tile for a (rows, 128) copy: byte-targeted, dtype-aware, capped at
    the (rounded-up) full extent.  Divisibility is NOT required; the grid uses
    cdiv and Pallas masks the ragged last block."""
    gran = _sublane_granularity(itemsize)
    target = max(gran, (_TILE_TARGET_BYTES // (_LANE * itemsize)) // gran * gran)
    if rows <= target:
        return _round_up(rows, gran)
    return target


def _block_elems_1d(total: int, itemsize: int) -> int:
    """Block size for the 1-D fallback: multiple of 8*128*packing elements."""
    gran = _sublane_granularity(itemsize) * _LANE
    target = max(gran, (_TILE_TARGET_BYTES // itemsize) // gran * gran)
    if total <= target:
        return _round_up(total, gran)
    return target


def patch_embedding_zero_copy(x: jax.Array, patch_size: int) -> jax.Array:
    """Preferred path when no kernel boundary is needed: torch.reshape is a
    pure metadata op, so this moves zero bytes."""
    return jnp.reshape(x, (x.shape[0], -1, patch_size))


def patch_embedding(x: jax.Array, patch_size: int) -> jax.Array:
    """Pallas equivalent of PatchEmbedding.forward (materializing copy).

    Args:
      x: [N, C, H, W] array (NCHW, like the PyTorch module's input).
      patch_size: size of the trailing patch dimension.

    Returns:
      [N, L, patch_size] with L = C*H*W // patch_size; element order identical
      to torch.reshape on a contiguous NCHW tensor.
    """
    N = x.shape[0]
    per_sample = math.prod(x.shape[1:])
    assert per_sample % patch_size == 0, "C*H*W must be divisible by patch_size"
    L = per_sample // patch_size
    total = N * per_sample

    itemsize = jnp.dtype(x.dtype).itemsize
    cost = pl.CostEstimate(
        flops=0, transcendentals=0, bytes_accessed=2 * total * itemsize
    )
    cparams = pltpu.CompilerParams(
        dimension_semantics=("parallel",),
        vmem_limit_bytes=_VMEM_LIMIT_BYTES,
    )

    if total % _LANE == 0:
        # Lane-dense path: flatten batch + features into one (rows, 128) slab
        # (free metadata reshape) and copy big row tiles over a cdiv grid.
        rows = total // _LANE
        tr = _tile_rows(rows, itemsize)
        x2 = jnp.reshape(x, (rows, _LANE))
        out = pl.pallas_call(
            _copy_kernel,
            out_shape=jax.ShapeDtypeStruct((rows, _LANE), x.dtype),
            grid_spec=pltpu.PrefetchScalarGridSpec(
                num_scalar_prefetch=0,
                grid=(pl.cdiv(rows, tr),),
                in_specs=[pl.BlockSpec((tr, _LANE), lambda r: (r, 0))],
                out_specs=pl.BlockSpec((tr, _LANE), lambda r: (r, 0)),
            ),
            compiler_params=cparams,
            cost_estimate=cost,
        )(x2)
    else:
        # Fallback for totals not divisible by 128: flatten to 1-D and copy
        # large lane-aligned blocks; the ragged last block is masked.
        blk = _block_elems_1d(total, itemsize)
        x1 = jnp.reshape(x, (total,))
        out = pl.pallas_call(
            _copy_kernel,
            out_shape=jax.ShapeDtypeStruct((total,), x.dtype),
            grid_spec=pltpu.PrefetchScalarGridSpec(
                num_scalar_prefetch=0,
                grid=(pl.cdiv(total, blk),),
                in_specs=[pl.BlockSpec((blk,), lambda r: (r,))],
                out_specs=pl.BlockSpec((blk,), lambda r: (r,)),
            ),
            compiler_params=cparams,
            cost_estimate=cost,
        )(x1)

    # Free wrapper-side reshape to the module's output layout.
    return jnp.reshape(out, (N, L, patch_size))


if __name__ == "__main__":
    # Small deterministic example: N=2, C=4, H=W=16, patch_size=8 -> [2, 128, 8]
    key = jax.random.PRNGKey(0)
    N, C, H, W = 2, 4, 16, 16
    patch_size = 8

    x = jax.random.normal(key, (N, C, H, W), dtype=jnp.float32)

    out = patch_embedding(x, patch_size)
    out = jax.block_until_ready(out)

    # Reference: plain row-major reshape (exact PyTorch semantics).
    ref = jnp.reshape(x, (N, -1, patch_size))
    assert out.shape == (N, C * H * W // patch_size, patch_size)
    assert out.dtype == x.dtype
    assert bool(jnp.array_equal(out, ref))
    assert bool(jnp.array_equal(patch_embedding_zero_copy(x, patch_size), ref))

    print("KERNEL_OK")
</pallas_src>

<mosaic_0001>
module attributes {stable_mosaic.version = 11 : i64} {
  func.func @_copy_kernel(%arg0: i32, %arg1: memref<16x128xf32, #tpu.memory_space<vmem>>, %arg2: memref<16x128xf32, #tpu.memory_space<vmem>>) attributes {dimension_semantics = [#tpu.dimension_semantics<parallel>], iteration_bounds = array<i64: 1>, scalar_prefetch = 0 : i64, scratch_operands = 0 : i64, tpu.core_type = #tpu.core_type<tc>, window_params = [{transform_indices = @transform_0, window_bounds = array<i64: 16, 128>}, {transform_indices = @transform_1, window_bounds = array<i64: 16, 128>}]} {
    %c0 = arith.constant 0 : index
    %c0_0 = arith.constant 0 : index
    %0 = vector.load %arg1[%c0, %c0_0] : memref<16x128xf32, #tpu.memory_space<vmem>>, vector<16x128xf32>
    %c0_1 = arith.constant 0 : index
    %c0_2 = arith.constant 0 : index
    %1 = vector.load %arg2[%c0_1, %c0_2] : memref<16x128xf32, #tpu.memory_space<vmem>>, vector<16x128xf32>
    tpu.vector_store %arg2[%c0_1, %c0_2], %0 {strides = array<i32>} : memref<16x128xf32, #tpu.memory_space<vmem>>, vector<16x128xf32>,
    return
  }
  func.func @transform_0(%arg0: i32) -> (i32, i32) {
    %c0_i32 = arith.constant 0 : i32
    %c0_i32_0 = arith.constant 0 : i32
    return %arg0, %c0_i32 : i32, i32
  }
  func.func @transform_1(%arg0: i32) -> (i32, i32) {
    %c0_i32 = arith.constant 0 : i32
    %c0_i32_0 = arith.constant 0 : i32
    return %arg0, %c0_i32 : i32, i32
  }
}

</mosaic_0001>

<llo_original>
// kernel: tpu_custom_call.1
$region0: #{tpu_custom_call.1}
  #allocation0 [shape = 'u32[]', space=smem, size = 0x4, offset = 0x4, fixed_abs, tag = 'smem constant byte address 0x4 - core index']
  #allocation1 [shape = 'u32[144,128]{1,0:T(1,128)}', space=vmem, size = 0x12000, scoped, tag = 'internal scratch']
  %s0 = inlined_call_operand.hbm [shape: f32[16,128], index: 0, kind: input, shape index: {}]
  %s1 = inlined_call_operand.hbm [shape: f32[16,128], index: 1, kind: output, shape index: {}]
  %s2 = sld [smem:[#allocation0]]
  $region18: #{tpu_custom_call.1} parent=0
    _
  %s4 = ssub.s32 1, %s2
  %s5 = scalar_select 0, %s4, %s2
  $region1: #{tpu_custom_call.1} parent=0
    #allocation2 [shape = 'u8[8192]{0}', space=vmem, size = 0x2000, scoped, tag = 'input window, operand 0, single buffered']
    #allocation3 [shape = 's32[1]{0}', space=sflag, size = 0x4, scoped, tag = 'scoped memory for tpu_custom_call.1']
    #allocation4 [shape = 's32[1]{0}', space=sflag, size = 0x4, scoped, tag = 'scoped memory for tpu_custom_call.1']
    #allocation5 [shape = 'u8[8192]{0}', space=vmem, size = 0x2000, scoped, tag = 'output window, operand 0, single buffered']
    %6 = vsyncpa [#allocation3], 0
    %7 = vsyncpa [#allocation4], 0
    // Predicated region
    $region2: #{tpu_custom_call.1} parent=1 // pred_check
      _
    $region3: #{tpu_custom_call.1} parent=1 // pred_check_branch
      %9 = sbr.rel (0) target = $region5
    $region4: #{tpu_custom_call.1} parent=1 // pred_region
      %s11 = ssub.s32 256, 256
      %12 = vsyncadd [#allocation3], %s11
      %s13 = sshll.u32 [#allocation2], 4
      %s14 = int_to_ptr.vmem [resolvable:$true] %s13
      %19 = dma.hbm_to_vmem [thread:$0]  %s0, 256, %s14, [#allocation3], 128, 128, 8
    $region5: #{tpu_custom_call.1} parent=1 // pred_fallthru
      _
    // Predicated region
    $region6: #{tpu_custom_call.1} parent=1 // pred_check
      _
    $region7: #{tpu_custom_call.1} parent=1 // pred_check_branch
      %21 = sbr.rel (0) target = $region9
    $region8: #{tpu_custom_call.1} parent=1 // pred_region
      %22 = dma.done [#allocation3], 256
    $region9: #{tpu_custom_call.1} parent=1 // pred_fallthru
      _
    %v23 = vld [vmem:[#allocation2] sm:$0xff]
    %v24 = vld [vmem:[#allocation2 + $0x8] sm:$0xff]
    %25 = vst [vmem:[#allocation5] sm:$0xff] %v23
    %26 = vst [vmem:[#allocation5 + $0x8] sm:$0xff] %v24
    // Predicated region
    $region10: #{tpu_custom_call.1} parent=1 // pred_check
      _
    $region11: #{tpu_custom_call.1} parent=1 // pred_check_branch
      %28 = sbr.rel (0) target = $region13
    $region12: #{tpu_custom_call.1} parent=1 // pred_region
      %s30 = ssub.s32 256, 256
      %31 = vsyncadd [#allocation4], %s30
      %s32 = sshll.u32 [#allocation5], 4
      %s33 = int_to_ptr.vmem [resolvable:$true] %s32
      %38 = dma.vmem_to_hbm [thread:$0]  %s33, 256, %s1, [#allocation4], 128, 128, 8
    $region13: #{tpu_custom_call.1} parent=1 // pred_fallthru
      _
    // Predicated region
    $region14: #{tpu_custom_call.1} parent=1 // pred_check
      _
    $region15: #{tpu_custom_call.1} parent=1 // pred_check_branch
      %40 = sbr.rel (0) target = $region17
    $region16: #{tpu_custom_call.1} parent=1 // pred_region
      %41 = dma.done [#allocation4], 256
    $region17: #{tpu_custom_call.1} parent=1 // pred_fallthru
      _
    %42 = vsyncpa [#allocation3], 1
    %43 = vsyncpa [#allocation4], 1

</llo_original>
